<compile_context>
chip_gen: v7x
topology: tpu7x:2x2x1
jax: 0.10.0
libtpu: 0.0.40
codegen_flags: <defaults>
</compile_context>

<pallas_src>
import functools
import math

import jax
import jax.numpy as jnp
import numpy as np
from jax.experimental import pallas as pl
from jax.experimental.pallas import tpu as pltpu

REG_WEIGHT = 0.5          # reg_weight passed to DERLoss.__init__
REDUCTION = "mean"        # der_reduction

_LANE = 128               # TPU lane width
_MAX_PARTIALS = 2         # independent partial sums (2-TensorCore split on v7x)
_MAX_LANES_PER_TILE = 2048
_INPUT_VMEM_BUDGET = 8 * 1024 * 1024   # for 5 double-buffered input blocks

_NEG_HALF_LOG_PI = -0.5 * math.log(math.pi)

# ---------------------------------------------------------------------------
# Lanczos lgamma (g = 7, n = 9) in Boost-style rational form.
#   A(z) = c0 + sum_i c_i/(z+i)  ==  P(z)/Q(z),   Q(z) = prod_{i=0..7}(z+i)
#   lgamma(z) = 0.5*log(2*pi) + (z-0.5)*log(z+6.5) - (z+6.5) + log(A(z))
# Only the difference lgamma(a+0.5) - lgamma(a) is needed by the NIG log-prob,
# so the 0.5*log(2*pi) and most of the linear terms cancel.
# ---------------------------------------------------------------------------
_LANCZOS_C0 = 0.99999999999980993
_LANCZOS_C = (
    676.5203681218851, -1259.1392167224028, 771.32342877765313,
    -176.61502916214059, 12.507343278686905, -0.13857109526572012,
    9.9843695780195716e-6, 1.5056327351493116e-7,
)


def _lanczos_rational_coeffs():
    """Fold the Lanczos partial fractions into a single rational P(z)/Q(z).

    Done once on the host in float64 (numpy). In the kernel each A(z)
    evaluation then costs two Horner chains (pure VALU FMAs) instead of
    eight EUP divides.
    """
    q = np.array([1.0])
    for i in range(8):
        q = np.polymul(q, np.array([1.0, float(i)]))          # * (z + i)
    p = _LANCZOS_C0 * q
    for i, ci in enumerate(_LANCZOS_C):
        qi = np.array([1.0])
        for j in range(8):
            if j != i:
                qi = np.polymul(qi, np.array([1.0, float(j)]))
        p = np.polyadd(p, ci * qi)
    return tuple(float(v) for v in p), tuple(float(v) for v in q)


_P_COEFFS, _Q_COEFFS = _lanczos_rational_coeffs()


def _horner(z, coeffs):
    acc = jnp.full(z.shape, jnp.float32(coeffs[0]), dtype=jnp.float32)
    for c in coeffs[1:]:
        acc = acc * z + jnp.float32(c)
    return acc


def _lgamma_half_diff(a):
    """lgamma(a + 0.5) - lgamma(a), fused. Valid for a > ~0.6 (NIG: alpha > 1)."""
    pa, qa = _horner(a, _P_COEFFS), _horner(a, _Q_COEFFS)
    ah = a + 0.5
    pah, qah = _horner(ah, _P_COEFFS), _horner(ah, _Q_COEFFS)
    # A(a+0.5)/A(a) as a product of two O(1) ratios (avoids f32 overflow of
    # the P*Q cross-products for large alpha).
    ratio = (pah / pa) * (qa / qah)
    return (a * jnp.log(a + 7.0)
            - (a - 0.5) * jnp.log(a + 6.5)
            - 0.5
            + jnp.log(ratio))


def _der_loss_kernel(loc_ref, lmbda_ref, alpha_ref, beta_ref, tgt_ref, out_ref,
                     *, batch, lanes_per_tile, tiles_per_partial, reg_weight):
    c = pl.program_id(0)          # partial-sum index  ("parallel")
    i = pl.program_id(1)          # batch-tile index   ("arbitrary" reduction)

    # Zero the VMEM-resident partial-sum block at the start of each reduction.
    @pl.when(i == 0)
    def _():
        out_ref[...] = jnp.zeros_like(out_ref)

    loc = loc_ref[...]            # [D, TB]: event dim on sublanes, batch on lanes
    lmbda = lmbda_ref[...]
    alpha = alpha_ref[...]
    beta = beta_ref[...]
    tgt = tgt_ref[...]

    diff = tgt - loc
    gam = 2.0 * beta * (1.0 + lmbda)

    # NIG negative log-likelihood: log(pi/lmbda) folded to const + log(lmbda),
    # the two lgammas fused into one rational-Lanczos difference.
    log_prob = (
        jnp.float32(_NEG_HALF_LOG_PI)
        + 0.5 * jnp.log(lmbda)
        + alpha * jnp.log(gam)
        - (alpha + 0.5) * jnp.log(gam + lmbda * diff * diff)
        + _lgamma_half_diff(alpha)
    )
    nll = -log_prob                                            # [D, TB]

    # Mask lanes that are padding past the true batch size (batch is static).
    col0 = (c * tiles_per_partial + i) * lanes_per_tile
    col = col0 + jax.lax.broadcasted_iota(jnp.int32, (1, lanes_per_tile), 1)
    valid = (col < batch).astype(jnp.float32)                  # [1, TB]

    # sum(loss) = sum(nll) + w * sum_b( l1_b * sum_d(2*lmbda+alpha)_b )
    nll_sum = jnp.sum(nll * valid)
    l1 = jnp.sum(jnp.abs(diff), axis=0, keepdims=True)         # [1, TB]
    s = jnp.sum(2.0 * lmbda + alpha, axis=0, keepdims=True)    # [1, TB]
    reg_sum = jnp.sum(l1 * s * valid)

    # Accumulate into the lane-dense output block; it stays in VMEM across the
    # inner axis and is written back to HBM only once per partial.
    out_ref[...] += nll_sum + jnp.float32(reg_weight) * reg_sum


def _round_up(x, m):
    return ((x + m - 1) // m) * m


def _cdiv(a, b):
    return (a + b - 1) // b


def der_loss(loc, lmbda, alpha, beta, targets,
             reg_weight=REG_WEIGHT, reduction=REDUCTION):
    """Deep Evidential Regression loss (reduction 'mean' or 'sum')."""
    # TODO(synk): reduction='none' (per-element loss) and the padding_mask /
    # nanmean path of DistributionNLLLoss are not implemented here.
    assert reduction in ("mean", "sum")
    B, D = targets.shape

    # Lane-dense layout: [D, B_pad] with the batch mapped to the 128-lane axis.
    # Pick the largest batch tile that keeps the 5 double-buffered input blocks
    # under the VMEM budget (bigger tiles amortize the ~0.35us per-step cost).
    max_lanes_by_vmem = _INPUT_VMEM_BUDGET // (5 * 2 * max(D, 1) * 4)
    lanes_cap = max(_LANE, (max_lanes_by_vmem // _LANE) * _LANE)
    lanes_per_tile = max(_LANE,
                         min(_MAX_LANES_PER_TILE, lanes_cap, _round_up(B, _LANE)))

    total_tiles = _cdiv(B, lanes_per_tile)
    num_partials = _MAX_PARTIALS if total_tiles >= _MAX_PARTIALS else 1
    tiles_per_partial = _cdiv(total_tiles, num_partials)
    b_pad = num_partials * tiles_per_partial * lanes_per_tile

    def prep(x, fill):
        x = jnp.transpose(x.astype(jnp.float32))               # [D, B]
        return jnp.pad(x, ((0, 0), (0, b_pad - B)), constant_values=fill)

    # Padded columns get "safe" NIG parameters so no inf/nan leaks past the
    # in-kernel lane mask (they contribute exactly zero to both sums).
    args = (prep(loc, 0.0), prep(lmbda, 1.0), prep(alpha, 2.0),
            prep(beta, 1.0), prep(targets, 0.0))

    kernel = functools.partial(
        _der_loss_kernel, batch=B, lanes_per_tile=lanes_per_tile,
        tiles_per_partial=tiles_per_partial, reg_weight=float(reg_weight))

    in_spec = pl.BlockSpec(
        (D, lanes_per_tile), lambda c, i: (0, c * tiles_per_partial + i))

    partials = pl.pallas_call(
        kernel,
        out_shape=jax.ShapeDtypeStruct((1, num_partials * _LANE), jnp.float32),
        grid=(num_partials, tiles_per_partial),
        in_specs=[in_spec] * 5,
        out_specs=pl.BlockSpec((1, _LANE), lambda c, i: (0, c)),
        compiler_params=pltpu.CompilerParams(
            dimension_semantics=("parallel", "arbitrary"),
            vmem_limit_bytes=32 * 1024 * 1024),
    )(*args)

    # Each 128-lane block holds its partial sum broadcast across all lanes.
    total = jnp.sum(partials.reshape(num_partials, _LANE)[:, 0])
    if reduction == "mean":
        return total / jnp.float32(B * D)
    return total


def der_loss_ref(loc, lmbda, alpha, beta, t, reg_weight=REG_WEIGHT):
    """Plain-JAX reference (uses jax.lax.lgamma) for correctness check."""
    gam = 2.0 * beta * (1.0 + lmbda)
    log_prob = (
        -0.5 * jnp.log(jnp.pi / lmbda)
        + alpha * jnp.log(gam)
        - (alpha + 0.5) * jnp.log(gam + lmbda * (t - loc) ** 2)
        - jax.lax.lgamma(alpha)
        + jax.lax.lgamma(alpha + 0.5)
    )
    nll = -log_prob
    reg = jnp.sum(jnp.abs(t - loc), axis=1, keepdims=True) * (2.0 * lmbda + alpha)
    loss = nll + reg_weight * reg
    return jnp.mean(loss)


if __name__ == "__main__":
    B, D = 16, 4
    key = jax.random.PRNGKey(0)
    k1, k2, k3, k4, k5 = jax.random.split(key, 5)

    # Deterministic synthetic NIG parameters with valid ranges:
    # lmbda > 0, alpha > 1, beta > 0.
    loc = jax.random.normal(k1, (B, D), dtype=jnp.float32)
    lmbda = (jax.nn.softplus(jax.random.normal(k2, (B, D))) + 0.1).astype(jnp.float32)
    alpha = (jax.nn.softplus(jax.random.normal(k3, (B, D))) + 1.0).astype(jnp.float32)
    beta = (jax.nn.softplus(jax.random.normal(k4, (B, D))) + 0.1).astype(jnp.float32)
    targets = jax.random.normal(k5, (B, D), dtype=jnp.float32)

    out = der_loss(loc, lmbda, alpha, beta, targets)
    out = jax.block_until_ready(out)

    ref = der_loss_ref(loc, lmbda, alpha, beta, targets)
    assert jnp.allclose(out, ref, rtol=1e-4, atol=1e-4), (out, ref)

    print("KERNEL_OK")
</pallas_src>

<mosaic_0001>
module attributes {stable_mosaic.version = 11 : i64} {
  func.func @_der_loss_kernel(%arg0: i32, %arg1: i32, %arg2: memref<4x128xf32, #tpu.memory_space<vmem>>, %arg3: memref<4x128xf32, #tpu.memory_space<vmem>>, %arg4: memref<4x128xf32, #tpu.memory_space<vmem>>, %arg5: memref<4x128xf32, #tpu.memory_space<vmem>>, %arg6: memref<4x128xf32, #tpu.memory_space<vmem>>, %arg7: memref<1x128xf32, #tpu.memory_space<vmem>>) attributes {dimension_semantics = [#tpu.dimension_semantics<parallel>, #tpu.dimension_semantics<arbitrary>], iteration_bounds = array<i64: 1, 1>, scalar_prefetch = 0 : i64, scratch_operands = 0 : i64, tpu.core_type = #tpu.core_type<tc>, window_params = [{transform_indices = @transform_0, window_bounds = array<i64: 4, 128>}, {transform_indices = @transform_1, window_bounds = array<i64: 4, 128>}, {transform_indices = @transform_2, window_bounds = array<i64: 4, 128>}, {transform_indices = @transform_3, window_bounds = array<i64: 4, 128>}, {transform_indices = @transform_4, window_bounds = array<i64: 4, 128>}, {transform_indices = @transform_5, window_bounds = array<i64: 1, 128>}]} {
    %c0_i32 = arith.constant 0 : i32
    %0 = arith.cmpi eq, %arg1, %c0_i32 : i32
    %1 = arith.extui %0 : i1 to i32
    %c0_i32_0 = arith.constant 0 : i32
    %2 = arith.cmpi ne, %1, %c0_i32_0 : i32
    scf.if %2 {
      %cst_66 = arith.constant 0.000000e+00 : f32
      %189 = vector.broadcast %cst_66 : f32 to vector<1x128xf32>
      %c0_67 = arith.constant 0 : index
      %c0_68 = arith.constant 0 : index
      %190 = vector.load %arg7[%c0_67, %c0_68] : memref<1x128xf32, #tpu.memory_space<vmem>>, vector<1x128xf32>
      tpu.vector_store %arg7[%c0_67, %c0_68], %189 {strides = array<i32>} : memref<1x128xf32, #tpu.memory_space<vmem>>, vector<1x128xf32>,
    } else {
    }
    %c0 = arith.constant 0 : index
    %c0_1 = arith.constant 0 : index
    %3 = vector.load %arg2[%c0, %c0_1] : memref<4x128xf32, #tpu.memory_space<vmem>>, vector<4x128xf32>
    %c0_2 = arith.constant 0 : index
    %c0_3 = arith.constant 0 : index
    %4 = vector.load %arg3[%c0_2, %c0_3] : memref<4x128xf32, #tpu.memory_space<vmem>>, vector<4x128xf32>
    %c0_4 = arith.constant 0 : index
    %c0_5 = arith.constant 0 : index
    %5 = vector.load %arg4[%c0_4, %c0_5] : memref<4x128xf32, #tpu.memory_space<vmem>>, vector<4x128xf32>
    %c0_6 = arith.constant 0 : index
    %c0_7 = arith.constant 0 : index
    %6 = vector.load %arg5[%c0_6, %c0_7] : memref<4x128xf32, #tpu.memory_space<vmem>>, vector<4x128xf32>
    %c0_8 = arith.constant 0 : index
    %c0_9 = arith.constant 0 : index
    %7 = vector.load %arg6[%c0_8, %c0_9] : memref<4x128xf32, #tpu.memory_space<vmem>>, vector<4x128xf32>
    %8 = arith.subf %7, %3 : vector<4x128xf32>
    %cst = arith.constant 2.000000e+00 : f32
    %9 = vector.broadcast %cst : f32 to vector<4x128xf32>
    %10 = arith.mulf %9, %6 : vector<4x128xf32>
    %cst_10 = arith.constant 1.000000e+00 : f32
    %11 = vector.broadcast %cst_10 : f32 to vector<4x128xf32>
    %12 = arith.addf %11, %4 : vector<4x128xf32>
    %13 = arith.mulf %10, %12 : vector<4x128xf32>
    %14 = math.log %4 : vector<4x128xf32>
    %cst_11 = arith.constant 5.000000e-01 : f32
    %15 = vector.broadcast %cst_11 : f32 to vector<4x128xf32>
    %16 = arith.mulf %15, %14 : vector<4x128xf32>
    %cst_12 = arith.constant -0.572364926 : f32
    %17 = vector.broadcast %cst_12 : f32 to vector<4x128xf32>
    %18 = arith.addf %17, %16 : vector<4x128xf32>
    %19 = math.log %13 : vector<4x128xf32>
    %20 = arith.mulf %5, %19 : vector<4x128xf32>
    %21 = arith.addf %18, %20 : vector<4x128xf32>
    %cst_13 = arith.constant 5.000000e-01 : f32
    %22 = vector.broadcast %cst_13 : f32 to vector<4x128xf32>
    %23 = arith.addf %5, %22 : vector<4x128xf32>
    %24 = arith.mulf %4, %8 : vector<4x128xf32>
    %25 = arith.mulf %24, %8 : vector<4x128xf32>
    %26 = arith.addf %13, %25 : vector<4x128xf32>
    %27 = math.log %26 : vector<4x128xf32>
    %28 = arith.mulf %23, %27 : vector<4x128xf32>
    %29 = arith.subf %21, %28 : vector<4x128xf32>
    %cst_14 = arith.constant 1.000000e+00 : f32
    %30 = vector.broadcast %cst_14 : f32 to vector<4x128xf32>
    %31 = arith.mulf %30, %5 : vector<4x128xf32>
    %cst_15 = arith.constant 52.4583321 : f32
    %32 = vector.broadcast %cst_15 : f32 to vector<4x128xf32>
    %33 = arith.addf %31, %32 : vector<4x128xf32>
    %34 = arith.mulf %33, %5 : vector<4x128xf32>
    %cst_16 = arith.constant 1203.83423 : f32
    %35 = vector.broadcast %cst_16 : f32 to vector<4x128xf32>
    %36 = arith.addf %34, %35 : vector<4x128xf32>
    %37 = arith.mulf %36, %5 : vector<4x128xf32>
    %cst_17 = arith.constant 15784.8809 : f32
    %38 = vector.broadcast %cst_17 : f32 to vector<4x128xf32>
    %39 = arith.addf %37, %38 : vector<4x128xf32>
    %40 = arith.mulf %39, %5 : vector<4x128xf32>
    %cst_18 = arith.constant 129347.258 : f32
    %41 = vector.broadcast %cst_18 : f32 to vector<4x128xf32>
    %42 = arith.addf %40, %41 : vector<4x128xf32>
    %43 = arith.mulf %42, %5 : vector<4x128xf32>
    %cst_19 = arith.constant 678289.688 : f32
    %44 = vector.broadcast %cst_19 : f32 to vector<4x128xf32>
    %45 = arith.addf %43, %44 : vector<4x128xf32>
    %46 = arith.mulf %45, %5 : vector<4x128xf32>
    %cst_20 = arith.constant 2222880.5 : f32
    %47 = vector.broadcast %cst_20 : f32 to vector<4x128xf32>
    %48 = arith.addf %46, %47 : vector<4x128xf32>
    %49 = arith.mulf %48, %5 : vector<4x128xf32>
    %cst_21 = arith.constant 0x4A7E0D50 : f32
    %50 = vector.broadcast %cst_21 : f32 to vector<4x128xf32>
    %51 = arith.addf %49, %50 : vector<4x128xf32>
    %52 = arith.mulf %51, %5 : vector<4x128xf32>
    %cst_22 = arith.constant 3409662.75 : f32
    %53 = vector.broadcast %cst_22 : f32 to vector<4x128xf32>
    %54 = arith.addf %52, %53 : vector<4x128xf32>
    %cst_23 = arith.constant 1.000000e+00 : f32
    %55 = vector.broadcast %cst_23 : f32 to vector<4x128xf32>
    %56 = arith.mulf %55, %5 : vector<4x128xf32>
    %cst_24 = arith.constant 2.800000e+01 : f32
    %57 = vector.broadcast %cst_24 : f32 to vector<4x128xf32>
    %58 = arith.addf %56, %57 : vector<4x128xf32>
    %59 = arith.mulf %58, %5 : vector<4x128xf32>
    %cst_25 = arith.constant 3.220000e+02 : f32
    %60 = vector.broadcast %cst_25 : f32 to vector<4x128xf32>
    %61 = arith.addf %59, %60 : vector<4x128xf32>
    %62 = arith.mulf %61, %5 : vector<4x128xf32>
    %cst_26 = arith.constant 1.960000e+03 : f32
    %63 = vector.broadcast %cst_26 : f32 to vector<4x128xf32>
    %64 = arith.addf %62, %63 : vector<4x128xf32>
    %65 = arith.mulf %64, %5 : vector<4x128xf32>
    %cst_27 = arith.constant 6.769000e+03 : f32
    %66 = vector.broadcast %cst_27 : f32 to vector<4x128xf32>
    %67 = arith.addf %65, %66 : vector<4x128xf32>
    %68 = arith.mulf %67, %5 : vector<4x128xf32>
    %cst_28 = arith.constant 1.313200e+04 : f32
    %69 = vector.broadcast %cst_28 : f32 to vector<4x128xf32>
    %70 = arith.addf %68, %69 : vector<4x128xf32>
    %71 = arith.mulf %70, %5 : vector<4x128xf32>
    %cst_29 = arith.constant 1.306800e+04 : f32
    %72 = vector.broadcast %cst_29 : f32 to vector<4x128xf32>
    %73 = arith.addf %71, %72 : vector<4x128xf32>
    %74 = arith.mulf %73, %5 : vector<4x128xf32>
    %cst_30 = arith.constant 5.040000e+03 : f32
    %75 = vector.broadcast %cst_30 : f32 to vector<4x128xf32>
    %76 = arith.addf %74, %75 : vector<4x128xf32>
    %77 = arith.mulf %76, %5 : vector<4x128xf32>
    %cst_31 = arith.constant 0.000000e+00 : f32
    %78 = vector.broadcast %cst_31 : f32 to vector<4x128xf32>
    %79 = arith.addf %77, %78 : vector<4x128xf32>
    %cst_32 = arith.constant 5.000000e-01 : f32
    %80 = vector.broadcast %cst_32 : f32 to vector<4x128xf32>
    %81 = arith.addf %5, %80 : vector<4x128xf32>
    %cst_33 = arith.constant 1.000000e+00 : f32
    %82 = vector.broadcast %cst_33 : f32 to vector<4x128xf32>
    %83 = arith.mulf %82, %81 : vector<4x128xf32>
    %cst_34 = arith.constant 52.4583321 : f32
    %84 = vector.broadcast %cst_34 : f32 to vector<4x128xf32>
    %85 = arith.addf %83, %84 : vector<4x128xf32>
    %86 = arith.mulf %85, %81 : vector<4x128xf32>
    %cst_35 = arith.constant 1203.83423 : f32
    %87 = vector.broadcast %cst_35 : f32 to vector<4x128xf32>
    %88 = arith.addf %86, %87 : vector<4x128xf32>
    %89 = arith.mulf %88, %81 : vector<4x128xf32>
    %cst_36 = arith.constant 15784.8809 : f32
    %90 = vector.broadcast %cst_36 : f32 to vector<4x128xf32>
    %91 = arith.addf %89, %90 : vector<4x128xf32>
    %92 = arith.mulf %91, %81 : vector<4x128xf32>
    %cst_37 = arith.constant 129347.258 : f32
    %93 = vector.broadcast %cst_37 : f32 to vector<4x128xf32>
    %94 = arith.addf %92, %93 : vector<4x128xf32>
    %95 = arith.mulf %94, %81 : vector<4x128xf32>
    %cst_38 = arith.constant 678289.688 : f32
    %96 = vector.broadcast %cst_38 : f32 to vector<4x128xf32>
    %97 = arith.addf %95, %96 : vector<4x128xf32>
    %98 = arith.mulf %97, %81 : vector<4x128xf32>
    %cst_39 = arith.constant 2222880.5 : f32
    %99 = vector.broadcast %cst_39 : f32 to vector<4x128xf32>
    %100 = arith.addf %98, %99 : vector<4x128xf32>
    %101 = arith.mulf %100, %81 : vector<4x128xf32>
    %cst_40 = arith.constant 0x4A7E0D50 : f32
    %102 = vector.broadcast %cst_40 : f32 to vector<4x128xf32>
    %103 = arith.addf %101, %102 : vector<4x128xf32>
    %104 = arith.mulf %103, %81 : vector<4x128xf32>
    %cst_41 = arith.constant 3409662.75 : f32
    %105 = vector.broadcast %cst_41 : f32 to vector<4x128xf32>
    %106 = arith.addf %104, %105 : vector<4x128xf32>
    %cst_42 = arith.constant 1.000000e+00 : f32
    %107 = vector.broadcast %cst_42 : f32 to vector<4x128xf32>
    %108 = arith.mulf %107, %81 : vector<4x128xf32>
    %cst_43 = arith.constant 2.800000e+01 : f32
    %109 = vector.broadcast %cst_43 : f32 to vector<4x128xf32>
    %110 = arith.addf %108, %109 : vector<4x128xf32>
    %111 = arith.mulf %110, %81 : vector<4x128xf32>
    %cst_44 = arith.constant 3.220000e+02 : f32
    %112 = vector.broadcast %cst_44 : f32 to vector<4x128xf32>
    %113 = arith.addf %111, %112 : vector<4x128xf32>
    %114 = arith.mulf %113, %81 : vector<4x128xf32>
    %cst_45 = arith.constant 1.960000e+03 : f32
    %115 = vector.broadcast %cst_45 : f32 to vector<4x128xf32>
    %116 = arith.addf %114, %115 : vector<4x128xf32>
    %117 = arith.mulf %116, %81 : vector<4x128xf32>
    %cst_46 = arith.constant 6.769000e+03 : f32
    %118 = vector.broadcast %cst_46 : f32 to vector<4x128xf32>
    %119 = arith.addf %117, %118 : vector<4x128xf32>
    %120 = arith.mulf %119, %81 : vector<4x128xf32>
    %cst_47 = arith.constant 1.313200e+04 : f32
    %121 = vector.broadcast %cst_47 : f32 to vector<4x128xf32>
    %122 = arith.addf %120, %121 : vector<4x128xf32>
    %123 = arith.mulf %122, %81 : vector<4x128xf32>
    %cst_48 = arith.constant 1.306800e+04 : f32
    %124 = vector.broadcast %cst_48 : f32 to vector<4x128xf32>
    %125 = arith.addf %123, %124 : vector<4x128xf32>
    %126 = arith.mulf %125, %81 : vector<4x128xf32>
    %cst_49 = arith.constant 5.040000e+03 : f32
    %127 = vector.broadcast %cst_49 : f32 to vector<4x128xf32>
    %128 = arith.addf %126, %127 : vector<4x128xf32>
    %129 = arith.mulf %128, %81 : vector<4x128xf32>
    %cst_50 = arith.constant 0.000000e+00 : f32
    %130 = vector.broadcast %cst_50 : f32 to vector<4x128xf32>
    %131 = arith.addf %129, %130 : vector<4x128xf32>
    %132 = arith.divf %106, %54 : vector<4x128xf32>
    %133 = arith.divf %79, %131 : vector<4x128xf32>
    %134 = arith.mulf %132, %133 : vector<4x128xf32>
    %cst_51 = arith.constant 7.000000e+00 : f32
    %135 = vector.broadcast %cst_51 : f32 to vector<4x128xf32>
    %136 = arith.addf %5, %135 : vector<4x128xf32>
    %137 = math.log %136 : vector<4x128xf32>
    %138 = arith.mulf %5, %137 : vector<4x128xf32>
    %cst_52 = arith.constant 5.000000e-01 : f32
    %139 = vector.broadcast %cst_52 : f32 to vector<4x128xf32>
    %140 = arith.subf %5, %139 : vector<4x128xf32>
    %cst_53 = arith.constant 6.500000e+00 : f32
    %141 = vector.broadcast %cst_53 : f32 to vector<4x128xf32>
    %142 = arith.addf %5, %141 : vector<4x128xf32>
    %143 = math.log %142 : vector<4x128xf32>
    %144 = arith.mulf %140, %143 : vector<4x128xf32>
    %145 = arith.subf %138, %144 : vector<4x128xf32>
    %cst_54 = arith.constant 5.000000e-01 : f32
    %146 = vector.broadcast %cst_54 : f32 to vector<4x128xf32>
    %147 = arith.subf %145, %146 : vector<4x128xf32>
    %148 = math.log %134 : vector<4x128xf32>
    %149 = arith.addf %147, %148 : vector<4x128xf32>
    %150 = arith.addf %29, %149 : vector<4x128xf32>
    %cst_55 = arith.constant 0.000000e+00 : f32
    %151 = vector.broadcast %cst_55 : f32 to vector<4x128xf32>
    %152 = arith.subf %151, %150 : vector<4x128xf32>
    %c1_i32 = arith.constant 1 : i32
    %153 = arith.muli %arg0, %c1_i32 : i32
    %154 = arith.addi %153, %arg1 : i32
    %c128_i32 = arith.constant 128 : i32
    %155 = arith.muli %154, %c128_i32 : i32
    %156 = tpu.iota {dimensions = array<i32: 1>} : vector<1x128xi32>
    %157 = vector.broadcast %155 : i32 to vector<1x128xi32>
    %158 = arith.addi %157, %156 : vector<1x128xi32>
    %c16_i32 = arith.constant 16 : i32
    %159 = vector.broadcast %c16_i32 : i32 to vector<1x128xi32>
    %160 = arith.cmpi slt, %158, %159 : vector<1x128xi32>
    %161 = arith.extui %160 : vector<1x128xi1> to vector<1x128xi32>
    %162 = arith.sitofp %161 : vector<1x128xi32> to vector<1x128xf32>
    %163 = vector.broadcast %162 : vector<1x128xf32> to vector<4x128xf32>
    %164 = arith.mulf %152, %163 : vector<4x128xf32>
    %165 = vector.shape_cast %164 : vector<4x128xf32> to vector<1x4x128xf32>
    %cst_56 = arith.constant dense<0.000000e+00> : vector<1xf32>
    %166 = vector.multi_reduction <add>, %165, %cst_56 [1, 2] : vector<1x4x128xf32> to vector<1xf32>
    %167 = vector.shape_cast %166 : vector<1xf32> to vector<1x1x1xf32>
    %168 = vector.extract %167[0, 0, 0] : f32 from vector<1x1x1xf32>
    %169 = math.absf %8 : vector<4x128xf32>
    %cst_57 = arith.constant dense<0.000000e+00> : vector<128xf32>
    %170 = vector.multi_reduction <add>, %169, %cst_57 [0] : vector<4x128xf32> to vector<128xf32>
    %171 = vector.shape_cast %170 : vector<128xf32> to vector<1x128xf32>
    %cst_58 = arith.constant 2.000000e+00 : f32
    %172 = vector.broadcast %cst_58 : f32 to vector<4x128xf32>
    %173 = arith.mulf %172, %4 : vector<4x128xf32>
    %174 = arith.addf %173, %5 : vector<4x128xf32>
    %cst_59 = arith.constant dense<0.000000e+00> : vector<128xf32>
    %175 = vector.multi_reduction <add>, %174, %cst_59 [0] : vector<4x128xf32> to vector<128xf32>
    %176 = vector.shape_cast %175 : vector<128xf32> to vector<1x128xf32>
    %177 = arith.mulf %171, %176 : vector<1x128xf32>
    %178 = arith.mulf %177, %162 : vector<1x128xf32>
    %179 = vector.shape_cast %178 : vector<1x128xf32> to vector<1x1x128xf32>
    %cst_60 = arith.constant dense<0.000000e+00> : vector<1xf32>
    %180 = vector.multi_reduction <add>, %179, %cst_60 [1, 2] : vector<1x1x128xf32> to vector<1xf32>
    %181 = vector.shape_cast %180 : vector<1xf32> to vector<1x1x1xf32>
    %182 = vector.extract %181[0, 0, 0] : f32 from vector<1x1x1xf32>
    %c0_61 = arith.constant 0 : index
    %c0_62 = arith.constant 0 : index
    %183 = vector.load %arg7[%c0_61, %c0_62] : memref<1x128xf32, #tpu.memory_space<vmem>>, vector<1x128xf32>
    %cst_63 = arith.constant 5.000000e-01 : f32
    %184 = arith.mulf %cst_63, %182 : f32
    %185 = arith.addf %168, %184 : f32
    %186 = vector.broadcast %185 : f32 to vector<1x128xf32>
    %187 = arith.addf %183, %186 : vector<1x128xf32>
    %c0_64 = arith.constant 0 : index
    %c0_65 = arith.constant 0 : index
    %188 = vector.load %arg7[%c0_64, %c0_65] : memref<1x128xf32, #tpu.memory_space<vmem>>, vector<1x128xf32>
    tpu.vector_store %arg7[%c0_64, %c0_65], %187 {strides = array<i32>} : memref<1x128xf32, #tpu.memory_space<vmem>>, vector<1x128xf32>,
    return
  }
  func.func @transform_0(%arg0: i32, %arg1: i32) -> (i32, i32) {
    %c1_i32 = arith.constant 1 : i32
    %0 = arith.muli %arg0, %c1_i32 : i32
    %1 = arith.addi %0, %arg1 : i32
    %c0_i32 = arith.constant 0 : i32
    %c0_i32_0 = arith.constant 0 : i32
    return %c0_i32, %1 : i32, i32
  }
  func.func @transform_1(%arg0: i32, %arg1: i32) -> (i32, i32) {
    %c1_i32 = arith.constant 1 : i32
    %0 = arith.muli %arg0, %c1_i32 : i32
    %1 = arith.addi %0, %arg1 : i32
    %c0_i32 = arith.constant 0 : i32
    %c0_i32_0 = arith.constant 0 : i32
    return %c0_i32, %1 : i32, i32
  }
  func.func @transform_2(%arg0: i32, %arg1: i32) -> (i32, i32) {
    %c1_i32 = arith.constant 1 : i32
    %0 = arith.muli %arg0, %c1_i32 : i32
    %1 = arith.addi %0, %arg1 : i32
    %c0_i32 = arith.constant 0 : i32
    %c0_i32_0 = arith.constant 0 : i32
    return %c0_i32, %1 : i32, i32
  }
  func.func @transform_3(%arg0: i32, %arg1: i32) -> (i32, i32) {
    %c1_i32 = arith.constant 1 : i32
    %0 = arith.muli %arg0, %c1_i32 : i32
    %1 = arith.addi %0, %arg1 : i32
    %c0_i32 = arith.constant 0 : i32
    %c0_i32_0 = arith.constant 0 : i32
    return %c0_i32, %1 : i32, i32
  }
  func.func @transform_4(%arg0: i32, %arg1: i32) -> (i32, i32) {
    %c1_i32 = arith.constant 1 : i32
    %0 = arith.muli %arg0, %c1_i32 : i32
    %1 = arith.addi %0, %arg1 : i32
    %c0_i32 = arith.constant 0 : i32
    %c0_i32_0 = arith.constant 0 : i32
    return %c0_i32, %1 : i32, i32
  }
  func.func @transform_5(%arg0: i32, %arg1: i32) -> (i32, i32) {
    %c0_i32 = arith.constant 0 : i32
    %c0_i32_0 = arith.constant 0 : i32
    return %c0_i32, %arg0 : i32, i32
  }
}

</mosaic_0001>

<llo_original>
// kernel: tpu_custom_call.1
$region0: #{tpu_custom_call.1}
  #allocation0 [shape = 'u32[]', space=smem, size = 0x4, offset = 0x4, fixed_abs, tag = 'smem constant byte address 0x4 - core index']
  #allocation1 [shape = 'u32[144,128]{1,0:T(1,128)}', space=vmem, size = 0x12000, scoped, tag = 'internal scratch']
  %s0 = inlined_call_operand.hbm [shape: f32[4,128], index: 0, kind: input, shape index: {}]
  %s1 = inlined_call_operand.hbm [shape: f32[4,128], index: 1, kind: input, shape index: {}]
  %s2 = inlined_call_operand.vmem [shape: f32[4,128], index: 2, kind: input, shape index: {}]
  %s3 = inlined_call_operand.vmem [shape: f32[4,128], index: 3, kind: input, shape index: {}]
  %s4 = inlined_call_operand.vmem [shape: f32[4,128], index: 4, kind: input, shape index: {}]
  %s5 = inlined_call_operand.hbm [shape: f32[1,128], index: 5, kind: output, shape index: {}]
  %s6 = sld [smem:[#allocation0]]
  $region42: #{tpu_custom_call.1} parent=0
    _
  %s8 = ssub.s32 1, %s6
  %s9 = scalar_select 0, %s8, %s6
  $region1: #{tpu_custom_call.1} parent=0
    #allocation2 [shape = 'u8[2048]{0}', space=vmem, size = 0x800, scoped, tag = 'input window, operand 0, single buffered']
    #allocation3 [shape = 's32[1]{0}', space=sflag, size = 0x4, scoped, tag = 'scoped memory for tpu_custom_call.1']
    #allocation4 [shape = 's32[1]{0}', space=sflag, size = 0x4, scoped, tag = 'scoped memory for tpu_custom_call.1']
    #allocation5 [shape = 'u8[2048]{0}', space=vmem, size = 0x800, scoped, tag = 'input window, operand 1, single buffered']
    #allocation6 [shape = 's32[1]{0}', space=sflag, size = 0x4, scoped, tag = 'scoped memory for tpu_custom_call.1']
    #allocation7 [shape = 'u8[512]{0}', space=vmem, size = 0x400, scoped, tag = 'output window, operand 0, single buffered']
    %10 = vsyncpa [#allocation3], 0
    %11 = vsyncpa [#allocation6], 0
    %12 = vsyncpa [#allocation4], 0
    // Predicated region
    $region2: #{tpu_custom_call.1} parent=1 // pred_check
      _
    $region3: #{tpu_custom_call.1} parent=1 // pred_check_branch
      %14 = sbr.rel (0) target = $region5
    $region4: #{tpu_custom_call.1} parent=1 // pred_region
      %s15 = sadd.s32 0, 0
      %s17 = ssub.s32 64, 64
      %18 = vsyncadd [#allocation3], %s17
      %s19 = smul.addr %s15, 64
      %s20 = scalar_lea.hbm %s0, %s19
      %s22 = sshll.u32 [#allocation2], 4
      %s23 = int_to_ptr.vmem [resolvable:$true] %s22
      %25 = dma.hbm_to_vmem [thread:$0]  %s20, 64, %s23, [#allocation3]
    $region5: #{tpu_custom_call.1} parent=1 // pred_fallthru
      _
    // Predicated region
    $region6: #{tpu_custom_call.1} parent=1 // pred_check
      _
    $region7: #{tpu_custom_call.1} parent=1 // pred_check_branch
      %27 = sbr.rel (0) target = $region9
    $region8: #{tpu_custom_call.1} parent=1 // pred_region
      %s28 = sadd.s32 0, 0
      %s30 = ssub.s32 64, 64
      %31 = vsyncadd [#allocation6], %s30
      %s32 = smul.addr %s28, 64
      %s33 = scalar_lea.hbm %s1, %s32
      %s35 = sshll.u32 [#allocation5], 4
      %s36 = int_to_ptr.vmem [resolvable:$true] %s35
      %38 = dma.hbm_to_vmem [thread:$0]  %s33, 64, %s36, [#allocation6]
    $region9: #{tpu_custom_call.1} parent=1 // pred_fallthru
      _
    // Predicated region
    $region10: #{tpu_custom_call.1} parent=1 // pred_check
      _
    $region11: #{tpu_custom_call.1} parent=1 // pred_check_branch
      %40 = sbr.rel (0) target = $region13
    $region12: #{tpu_custom_call.1} parent=1 // pred_region
      %s41 = sadd.s32 0, 0
      %p42 = scmp.lt.s32.totalorder %s41, 0
      %s43 = scalar_select %p42, %s41, 0
      %s44 = smul.addr %s43, 4
      %s45 = scalar_lea.vmem %s2, %s44
      %s46 = sadd.s32 0, 0
    $region13: #{tpu_custom_call.1} parent=1 // pred_fallthru
      _
    // Predicated region
    $region14: #{tpu_custom_call.1} parent=1 // pred_check
      _
    $region15: #{tpu_custom_call.1} parent=1 // pred_check_branch
      %48 = sbr.rel (0) target = $region17
    $region16: #{tpu_custom_call.1} parent=1 // pred_region
      %s49 = sadd.s32 0, 0
      %p50 = scmp.lt.s32.totalorder %s49, 0
      %s51 = scalar_select %p50, %s49, 0
      %s52 = smul.addr %s51, 4
      %s53 = scalar_lea.vmem %s3, %s52
      %s54 = sadd.s32 0, 0
    $region17: #{tpu_custom_call.1} parent=1 // pred_fallthru
      _
    // Predicated region
    $region18: #{tpu_custom_call.1} parent=1 // pred_check
      _
    $region19: #{tpu_custom_call.1} parent=1 // pred_check_branch
      %56 = sbr.rel (0) target = $region21
    $region20: #{tpu_custom_call.1} parent=1 // pred_region
      %s57 = sadd.s32 0, 0
      %p58 = scmp.lt.s32.totalorder %s57, 0
      %s59 = scalar_select %p58, %s57, 0
      %s60 = smul.addr %s59, 4
      %s61 = scalar_lea.vmem %s4, %s60
      %s62 = sadd.s32 0, 0
    $region21: #{tpu_custom_call.1} parent=1 // pred_fallthru
      _
    // Predicated region
    $region22: #{tpu_custom_call.1} parent=1 // pred_check
      _
    $region23: #{tpu_custom_call.1} parent=1 // pred_check_branch
      %64 = sbr.rel (0) target = $region25
    $region24: #{tpu_custom_call.1} parent=1 // pred_region
      %65 = dma.done [#allocation3], 64
    $region25: #{tpu_custom_call.1} parent=1 // pred_fallthru
      _
    // Predicated region
    $region26: #{tpu_custom_call.1} parent=1 // pred_check
      _
    $region27: #{tpu_custom_call.1} parent=1 // pred_check_branch
      %67 = sbr.rel (0) target = $region29
    $region28: #{tpu_custom_call.1} parent=1 // pred_region
      %68 = dma.done [#allocation6], 64
    $region29: #{tpu_custom_call.1} parent=1 // pred_fallthru
      _
    %s69 = sadd.s32 0, 0
    %p70 = scmp.lt.s32.totalorder %s69, 0
    %s71 = scalar_select %p70, %s69, 0
    %s72 = smul.addr %s71, 4
    %s73 = scalar_lea.vmem %s2, %s72
    %s74 = sadd.s32 0, 0
    %p75 = scmp.lt.s32.totalorder %s74, 0
    %s76 = scalar_select %p75, %s74, 0
    %s77 = smul.addr %s76, 4
    %s78 = scalar_lea.vmem %s3, %s77
    %s79 = sadd.s32 0, 0
    %p80 = scmp.lt.s32.totalorder %s79, 0
    %s81 = scalar_select %p80, %s79, 0
    %s82 = smul.addr %s81, 4
    %s83 = scalar_lea.vmem %s4, %s82
    %s84 = sadd.s32 0, 0
    %s85 = sadd.s32 0, 0
    %s86 = sadd.s32 0, 0
    %p87 = scmp.lt.s32.totalorder %s86, 0
    %s88 = scalar_select %p87, %s86, 0
    %s89 = smul.addr %s88, 4
    %s90 = scalar_lea.vmem %s2, %s89
    %s91 = sadd.s32 0, 0
    %s92 = sadd.s32 0, 0
    %p93 = scmp.lt.s32.totalorder %s92, 0
    %s94 = scalar_select %p93, %s92, 0
    %s95 = smul.addr %s94, 4
    %s96 = scalar_lea.vmem %s3, %s95
    %s97 = sadd.s32 0, 0
    %s98 = sadd.s32 0, 0
    %p99 = scmp.lt.s32.totalorder %s98, 0
    %s100 = scalar_select %p99, %s98, 0
    %s101 = smul.addr %s100, 4
    %s102 = scalar_lea.vmem %s4, %s101
    %s103 = sadd.s32 0, 0
    %p104 = scmp.eq.s32.totalorder 0, 0
    // Predicated region
    $region30: #{tpu_custom_call.1} parent=1 // pred_check
      %p105 = pneg %p104
    $region31: #{tpu_custom_call.1} parent=1 // pred_check_branch
      %107 = sbr.rel (%p105) target = $region33
    $region32: #{tpu_custom_call.1} parent=1 // pred_region
      %108 = vst [vmem:[#allocation7] sm:$0x1] 0.0
    $region33: #{tpu_custom_call.1} parent=1 // pred_fallthru
      _
    %v109 = vld [vmem:[#allocation2] sm:$0xf]
    %v110 = vld [vmem:[#allocation5] sm:$0xf]
    %v111 = vld [vmem:[%s90] sm:$0xf]
    %v112 = vld [vmem:[%s96] sm:$0xf]
    %v113 = vld [vmem:[%s102] sm:$0xf]
    %v114 = vsub.f32 %v113, %v109
    %v115 = vmul.f32 %v112, 2.0
    %v116 = vadd.f32 %v110, 1.0
    %v117 = vmul.f32 %v115, %v116
    %v118 = vlog2.pop %v110
    %v119 = vmul.f32 %v118, 0.6931472
    %v120 = vmul.f32 %v119, 0.5
    %v121 = vadd.f32 %v120, -0.5723649
    %v122 = vlog2.pop %v117
    %v123 = vmul.f32 %v122, 0.6931472
    %v124 = vmul.f32 %v111, %v123
    %v125 = vadd.f32 %v121, %v124
    %v126 = vadd.f32 %v111, 0.5
    %v127 = vmul.f32 %v110, %v114
    %v128 = vmul.f32 %v127, %v114
    %v129 = vadd.f32 %v117, %v128
    %v130 = vlog2.pop %v129
    %v131 = vmul.f32 %v130, 0.6931472
    %v132 = vmul.f32 %v126, %v131
    %v133 = vsub.f32 %v125, %v132
    %v134 = vadd.f32 %v111, 52.458332
    %v135 = vmul.f32 %v134, %v111
    %v136 = vadd.f32 %v135, 1203.8342
    %v137 = vmul.f32 %v136, %v111
    %v138 = vadd.f32 %v137, 15784.881
    %v139 = vmul.f32 %v138, %v111
    %v140 = vadd.f32 %v139, 129347.26
    %v141 = vmul.f32 %v140, %v111
    %v142 = vadd.f32 %v141, 678289.7
    %v143 = vmul.f32 %v142, %v111
    %v144 = vadd.f32 %v143, 2222880.5
    %v145 = vmul.f32 %v144, %v111
    %v146 = vadd.f32 %v145, 4162388.0
    %v147 = vmul.f32 %v146, %v111
    %v148 = vadd.f32 %v147, 3409662.8
    %v149 = vadd.f32 %v111, 28.0
    %v150 = vmul.f32 %v149, %v111
    %v151 = vadd.f32 %v150, 322.0
    %v152 = vmul.f32 %v151, %v111
    %v153 = vadd.f32 %v152, 1960.0
    %v154 = vmul.f32 %v153, %v111
    %v155 = vadd.f32 %v154, 6769.0
    %v156 = vmul.f32 %v155, %v111
    %v157 = vadd.f32 %v156, 13132.0
    %v158 = vmul.f32 %v157, %v111
    %v159 = vadd.f32 %v158, 13068.0
    %v160 = vmul.f32 %v159, %v111
    %v161 = vadd.f32 %v160, 5040.0
    %v162 = vmul.f32 %v161, %v111
    %v163 = vadd.f32 %v162, 0.0
    %v164 = vadd.f32 %v126, 52.458332
    %v165 = vmul.f32 %v164, %v126
    %v166 = vadd.f32 %v165, 1203.8342
    %v167 = vmul.f32 %v166, %v126
    %v168 = vadd.f32 %v167, 15784.881
    %v169 = vmul.f32 %v168, %v126
    %v170 = vadd.f32 %v169, 129347.26
    %v171 = vmul.f32 %v170, %v126
    %v172 = vadd.f32 %v171, 678289.7
    %v173 = vmul.f32 %v172, %v126
    %v174 = vadd.f32 %v173, 2222880.5
    %v175 = vmul.f32 %v174, %v126
    %v176 = vadd.f32 %v175, 4162388.0
    %v177 = vmul.f32 %v176, %v126
    %v178 = vadd.f32 %v177, 3409662.8
    %v179 = vadd.f32 %v126, 28.0
    %v180 = vmul.f32 %v179, %v126
    %v181 = vadd.f32 %v180, 322.0
    %v182 = vmul.f32 %v181, %v126
    %v183 = vadd.f32 %v182, 1960.0
    %v184 = vmul.f32 %v183, %v126
    %v185 = vadd.f32 %v184, 6769.0
    %v186 = vmul.f32 %v185, %v126
    %v187 = vadd.f32 %v186, 13132.0
    %v188 = vmul.f32 %v187, %v126
    %v189 = vadd.f32 %v188, 13068.0
    %v190 = vmul.f32 %v189, %v126
    %v191 = vadd.f32 %v190, 5040.0
    %v192 = vmul.f32 %v191, %v126
    %v193 = vadd.f32 %v192, 0.0
    %v194 = vrcp.pop %v148
    %v195 = vmul.f32 %v178, %v194
    %v196 = vrcp.pop %v193
    %v197 = vmul.f32 %v163, %v196
    %v198 = vmul.f32 %v195, %v197
    %v199 = vadd.f32 %v111, 7.0
    %v200 = vlog2.pop %v199
    %v201 = vmul.f32 %v200, 0.6931472
    %v202 = vmul.f32 %v111, %v201
    %v203 = vsub.f32 %v111, 0.5
    %v204 = vadd.f32 %v111, 6.5
    %v205 = vlog2.pop %v204
    %v206 = vmul.f32 %v205, 0.6931472
    %v207 = vmul.f32 %v203, %v206
    %v208 = vsub.f32 %v202, %v207
    %v209 = vsub.f32 %v208, 0.5
    %v210 = vlog2.pop %v198
    %v211 = vmul.f32 %v210, 0.6931472
    %v212 = vadd.f32 %v209, %v211
    %v213 = vadd.f32 %v133, %v212
    %v214 = vsub.f32 0.0, %v213
    %s215 = sadd.s32 0, 0
    %s216 = smul.u32 %s215, 128
    %v217 = vlaneseq
    %v218 = vand.u32 %v217, 127
    %v219 = vstv %s216
    %v220 = vadd.s32 %v219, %v218
    %vm221 = vcmp.lt.s32.totalorder %v220, 16
    %v222 = vsel %vm221, 1, 0
    %v223 = vcvt.s32.f32 %v222
    %v224 = vmul.f32 %v214, %v223
    %vm225 = vcmask 1043456
    %v226 = vsel %vm225, %v224, 0.0
    %227 = vadd.xlane.f32.xlu0 %v226
    %v228 = vpop.xlane.xlu0 %227
    %v229 = vrot.slane %v228, 4
    %v230 = vadd.f32 %v228, %v229
    %v231 = vrot.slane %v230, 2
    %v232 = vadd.f32 %v230, %v231
    %v233 = vrot.slane %v232, 1
    %v234 = vadd.f32 %v232, %v233
    %s235 = vtos %v234
    %v236 = vand.u32 2147483647, %v114
    %v237 = vsel %vm225, %v236, 0.0
    %v238 = vrot.slane %v237, 4
    %v239 = vadd.f32 %v237, %v238
    %v240 = vrot.slane %v239, 2
    %v241 = vadd.f32 %v239, %v240
    %v242 = vrot.slane %v241, 1
    %v243 = vadd.f32 %v241, %v242
    %v244 = vmul.f32 %v110, 2.0
    %v245 = vadd.f32 %v244, %v111
    %v246 = vsel %vm225, %v245, 0.0
    %v247 = vrot.slane %v246, 4
    %v248 = vadd.f32 %v246, %v247
    %v249 = vrot.slane %v248, 2
    %v250 = vadd.f32 %v248, %v249
    %v251 = vrot.slane %v250, 1
    %v252 = vadd.f32 %v250, %v251
    %v253 = vmul.f32 %v243, %v252
    %v254 = vmul.f32 %v253, %v223
    %vm255 = vcmask 1040384
    %v256 = vsel %vm255, %v254, 0.0
    %257 = vadd.xlane.f32.xlu0 %v256
    %v258 = vpop.xlane.xlu0 %257
    %v259 = vrot.slane %v258, 4
    %v260 = vadd.f32 %v258, %v259
    %v261 = vrot.slane %v260, 2
    %v262 = vadd.f32 %v260, %v261
    %v263 = vrot.slane %v262, 1
    %v264 = vadd.f32 %v262, %v263
    %s265 = vtos %v264
    %v266 = vld [vmem:[#allocation7] sm:$0x1]
    %s267 = smul.f32 %s265, 0.5
    %s268 = sadd.f32 %s235, %s267
    %v269 = vstv %s268
    %v270 = vadd.f32 %v266, %v269
    %271 = vst [vmem:[#allocation7] sm:$0x1] %v270
    // Predicated region
    $region34: #{tpu_custom_call.1} parent=1 // pred_check
      _
    $region35: #{tpu_custom_call.1} parent=1 // pred_check_branch
      %273 = sbr.rel (0) target = $region37
    $region36: #{tpu_custom_call.1} parent=1 // pred_region
      %s275 = ssub.s32 16, 16
      %276 = vsyncadd [#allocation4], %s275
      %s278 = sshll.u32 [#allocation7], 4
      %s279 = int_to_ptr.vmem [resolvable:$true] %s278
      %281 = dma.vmem_to_hbm [thread:$0]  %s279, 16, %s5, [#allocation4]
    $region37: #{tpu_custom_call.1} parent=1 // pred_fallthru
      _
    // Predicated region
    $region38: #{tpu_custom_call.1} parent=1 // pred_check
      _
    $region39: #{tpu_custom_call.1} parent=1 // pred_check_branch
      %283 = sbr.rel (0) target = $region41
    $region40: #{tpu_custom_call.1} parent=1 // pred_region
      %284 = dma.done [#allocation4], 16
    $region41: #{tpu_custom_call.1} parent=1 // pred_fallthru
      _
    %285 = vsyncpa [#allocation3], 1
    %286 = vsyncpa [#allocation6], 1
    %287 = vsyncpa [#allocation4], 1

</llo_original>
